<compile_context>
chip_gen: v5e
topology: v5e:2x2
jax: 0.10.0
libtpu: 0.0.40
codegen_flags: <defaults>
</compile_context>

<pallas_src>
import functools
import math

import jax
import jax.numpy as jnp
from jax.experimental import pallas as pl
from jax.experimental.pallas import tpu as pltpu


# ------------------------------- helpers -----------------------------------

def _round_up(x, m):
    return ((x + m - 1) // m) * m


def _pick_tile(n, candidates):
    for c in candidates:
        if n >= c and n % c == 0:
            return c
    return n   # full extent (allowed even if not a multiple of 8/128)


# ----------------------------- Pallas kernels -------------------------------

@functools.partial(jax.jit, static_argnames=("activation", "out_dtype"))
def matmul_pallas(a, w, bias, activation=None, out_dtype=jnp.bfloat16):
    """act(a @ w + bias).

    a: (M, K) any float dtype (cast to bf16),  w: (Kp, Np) bf16 pre-padded,
    bias: (1, Np) f32.  Returns (M, Np) in `out_dtype`; caller slices off the
    N padding.  f32 accumulation on a small per-tile scratch.
    """
    M, K = a.shape
    Kp, Np = w.shape
    a = a.astype(jnp.bfloat16)
    if Kp != K:
        a = jnp.pad(a, ((0, 0), (0, Kp - K)))

    TK = _pick_tile(Kp, (512, 256, 128))
    Mt = _pick_tile(M, (256, 128, 64, 32, 16, 8))
    Nt = _pick_tile(Np, (512, 256, 128))
    nk = Kp // TK

    def kernel(a_ref, w_ref, b_ref, o_ref, acc_ref):
        @pl.when(pl.program_id(2) == 0)
        def _():
            acc_ref[...] = jnp.zeros_like(acc_ref)

        acc_ref[...] += jnp.dot(a_ref[...], w_ref[...],
                                preferred_element_type=jnp.float32)

        @pl.when(pl.program_id(2) == nk - 1)
        def _():
            r = acc_ref[...] + b_ref[...]
            if activation == "relu":
                r = jnp.maximum(r, 0.0)
            elif activation == "tanh":
                r = jnp.tanh(r)
            o_ref[...] = r.astype(o_ref.dtype)

    return pl.pallas_call(
        kernel,
        out_shape=jax.ShapeDtypeStruct((M, Np), out_dtype),
        grid=(M // Mt, Np // Nt, nk),
        in_specs=[pl.BlockSpec((Mt, TK), lambda i, j, k: (i, k)),
                  pl.BlockSpec((TK, Nt), lambda i, j, k: (k, j)),
                  pl.BlockSpec((1, Nt), lambda i, j, k: (0, j))],
        out_specs=pl.BlockSpec((Mt, Nt), lambda i, j, k: (i, j)),
        scratch_shapes=[pltpu.VMEM((Mt, Nt), jnp.float32)],
        compiler_params=pltpu.CompilerParams(
            dimension_semantics=("parallel", "parallel", "arbitrary")),
    )(a, w, bias)


@functools.partial(jax.jit, static_argnames=("relu",))
def batchnorm_pallas(x, gamma, beta, relu=False):
    """Training-mode BatchNorm2d over rows (N*H*W) per channel, optional ReLU.

    Two row-tiled pipelined passes: (1) accumulate per-channel sum / sumsq,
    (2) normalize (+ ReLU).  Stats in f32, activations bf16.
    """
    R, C = x.shape
    Rt = _pick_tile(R, (1024, 512, 256, 128, 64, 32, 16, 8))
    nt = R // Rt

    def stats_kernel(x_ref, s_ref, q_ref):
        @pl.when(pl.program_id(0) == 0)
        def _():
            s_ref[...] = jnp.zeros_like(s_ref)
            q_ref[...] = jnp.zeros_like(q_ref)
        xx = x_ref[...].astype(jnp.float32)
        s_ref[...] += jnp.sum(xx, axis=0, keepdims=True)
        q_ref[...] += jnp.sum(xx * xx, axis=0, keepdims=True)

    s_sum, s_sq = pl.pallas_call(
        stats_kernel,
        out_shape=(jax.ShapeDtypeStruct((1, C), jnp.float32),
                   jax.ShapeDtypeStruct((1, C), jnp.float32)),
        grid=(nt,),
        in_specs=[pl.BlockSpec((Rt, C), lambda t: (t, 0))],
        out_specs=(pl.BlockSpec((1, C), lambda t: (0, 0)),
                   pl.BlockSpec((1, C), lambda t: (0, 0))),
        compiler_params=pltpu.CompilerParams(
            dimension_semantics=("arbitrary",)),
    )(x)

    inv_r = 1.0 / R

    def norm_kernel(x_ref, s_ref, q_ref, g_ref, b_ref, o_ref):
        xx = x_ref[...].astype(jnp.float32)
        mean = s_ref[...] * inv_r
        var = q_ref[...] * inv_r - mean * mean          # biased (PyTorch BN)
        y = (xx - mean) * jax.lax.rsqrt(var + 1e-5) * g_ref[...] + b_ref[...]
        if relu:
            y = jnp.maximum(y, 0.0)
        o_ref[...] = y.astype(o_ref.dtype)

    return pl.pallas_call(
        norm_kernel,
        out_shape=jax.ShapeDtypeStruct((R, C), jnp.bfloat16),
        grid=(nt,),
        in_specs=[pl.BlockSpec((Rt, C), lambda t: (t, 0)),
                  pl.BlockSpec((1, C), lambda t: (0, 0)),
                  pl.BlockSpec((1, C), lambda t: (0, 0)),
                  pl.BlockSpec((1, C), lambda t: (0, 0)),
                  pl.BlockSpec((1, C), lambda t: (0, 0))],
        out_specs=pl.BlockSpec((Rt, C), lambda t: (t, 0)),
        compiler_params=pltpu.CompilerParams(
            dimension_semantics=("parallel",)),
    )(x, s_sum, s_sq, gamma, beta)


@jax.jit
def attention_pallas(q, k, v):
    """q,k:(B,L,dq) v:(B,L,C).  out[b,i,c] = sum_j softmax_j(q_i . k_j) v[b,j,c].
    (No 1/sqrt(dq) scaling — matches the PATN reference.)"""
    B, L, dq = q.shape
    C = v.shape[2]

    def kernel(q_ref, k_ref, v_ref, o_ref):
        qq = q_ref[0]
        kk = k_ref[0]
        vv = v_ref[0]
        s = jnp.dot(qq, kk.T, preferred_element_type=jnp.float32)
        s = s - jnp.max(s, axis=-1, keepdims=True)
        e = jnp.exp(s)
        p = e * pl.reciprocal(jnp.sum(e, axis=-1, keepdims=True), approx=True)
        o_ref[0] = jnp.dot(p.astype(vv.dtype), vv,
                           preferred_element_type=jnp.float32).astype(o_ref.dtype)

    return pl.pallas_call(
        kernel,
        out_shape=jax.ShapeDtypeStruct((B, L, C), jnp.bfloat16),
        grid=(B,),
        in_specs=[pl.BlockSpec((1, L, dq), lambda b: (b, 0, 0)),
                  pl.BlockSpec((1, L, dq), lambda b: (b, 0, 0)),
                  pl.BlockSpec((1, L, C), lambda b: (b, 0, 0))],
        out_specs=pl.BlockSpec((1, L, C), lambda b: (b, 0, 0)),
        compiler_params=pltpu.CompilerParams(
            dimension_semantics=("parallel",)),
    )(q.astype(jnp.bfloat16), k.astype(jnp.bfloat16), v.astype(jnp.bfloat16))


@jax.jit
def adin_residual_pallas(content, style):
    """style + AdaIN(content, style). Stats over L, unbiased var + eps (f32)."""
    B, L, C = content.shape

    def kernel(c_ref, s_ref, o_ref):
        c = c_ref[0].astype(jnp.float32)
        s = s_ref[0].astype(jnp.float32)
        cm = jnp.mean(c, axis=0, keepdims=True)
        sm = jnp.mean(s, axis=0, keepdims=True)
        cv = jnp.sum((c - cm) ** 2, axis=0, keepdims=True) / (L - 1) + 1e-5
        sv = jnp.sum((s - sm) ** 2, axis=0, keepdims=True) / (L - 1) + 1e-5
        normalized = (c - cm) * jax.lax.rsqrt(cv)
        o_ref[0] = (s + normalized * jnp.sqrt(sv) + sm).astype(o_ref.dtype)

    return pl.pallas_call(
        kernel,
        out_shape=jax.ShapeDtypeStruct((B, L, C), jnp.bfloat16),
        grid=(B,),
        in_specs=[pl.BlockSpec((1, L, C), lambda b: (b, 0, 0)),
                  pl.BlockSpec((1, L, C), lambda b: (b, 0, 0))],
        out_specs=pl.BlockSpec((1, L, C), lambda b: (b, 0, 0)),
        compiler_params=pltpu.CompilerParams(
            dimension_semantics=("parallel",)),
    )(content, style)


# --------------------------- parameter creation ----------------------------

class KeyGen:
    def __init__(self, key):
        self._key = key

    def __call__(self):
        self._key, sub = jax.random.split(self._key)
        return sub


def init_conv(kg, cin, cout, k, use_bias):
    # Weights stored bf16, pre-padded: K -> mult of 128, N -> mult of 128
    # (lane-dense stores). Bias stored f32, padded to Np.
    K = k * k * cin
    Kp = _round_up(K, 128)
    Np = _round_up(cout, 128)
    w = jax.random.normal(kg(), (K, cout), jnp.float32) / math.sqrt(K)
    b = (jax.random.normal(kg(), (cout,), jnp.float32) * 0.01 if use_bias
         else jnp.zeros((cout,), jnp.float32))
    wp = jnp.zeros((Kp, Np), jnp.bfloat16).at[:K, :cout].set(w.astype(jnp.bfloat16))
    bp = jnp.zeros((1, Np), jnp.float32).at[0, :cout].set(b)
    return {"w": wp, "b": bp, "k": k, "cin": cin, "cout": cout}


def init_convT2(kg, cin, cout, use_bias=True):
    # ConvTranspose2d(cin, cout, kernel_size=2, stride=2): each input pixel
    # produces one 2x2 output block -> weight (cin, 2*2*cout).  cin and
    # 4*cout are already multiples of 128 for every use in this model.
    w = jax.random.normal(kg(), (cin, 4 * cout), jnp.float32) / math.sqrt(cin)
    b = (jax.random.normal(kg(), (cout,), jnp.float32) * 0.01 if use_bias
         else jnp.zeros((cout,), jnp.float32))
    return {"w": w.astype(jnp.bfloat16),
            "b": jnp.tile(b, 4).reshape(1, 4 * cout),
            "cin": cin, "cout": cout}


def init_convT3(kg, cin, cout, use_bias):
    # ConvTranspose2d(cin, cout, 3, stride=2, padding=1, output_padding=1),
    # stored directly in its equivalent direct-conv form.
    return init_conv(kg, cin, cout, 3, use_bias)


def init_bn(c):
    # PyTorch default init: gamma=1, beta=0.
    return {"gamma": jnp.ones((1, c), jnp.float32),
            "beta": jnp.zeros((1, c), jnp.float32)}


def init_patblock(kg, dim, cated):
    in2 = dim * 2 if cated else dim
    return {
        "cated": cated,
        "s1_conv1": init_conv(kg, dim, dim, 3, False), "s1_bn1": init_bn(dim),
        "s1_conv2": init_conv(kg, dim, dim, 3, False), "s1_bn2": init_bn(dim),
        "s2_conv1": init_conv(kg, in2, in2, 3, False), "s2_bn1": init_bn(in2),
        "s2_conv2": init_conv(kg, in2, dim, 3, False),
        "query": init_conv(kg, dim, dim // 8, 1, True),
        "key": init_conv(kg, dim, dim // 8, 1, True),
        "value": init_conv(kg, dim, dim, 1, True),
        "s1_down": init_conv(kg, dim, dim, 1, True),
        "s1_up": init_convT2(kg, dim, dim, True),
        "s2_down": init_conv(kg, dim * 2, dim, 1, True),
        "s2_up": init_convT2(kg, dim * 2, dim, True),
    }


def init_patn(key, input_nc, output_nc=3, ngf=64):
    kg = KeyGen(key)
    p = {}
    for name, cin in (("s1_down", input_nc[0]), ("s2_down", input_nc[1])):
        p[name] = {
            "conv0": init_conv(kg, cin, ngf, 7, False), "bn0": init_bn(ngf),
            "conv1": init_conv(kg, ngf, ngf * 2, 3, False), "bn1": init_bn(ngf * 2),
            "conv2": init_conv(kg, ngf * 2, ngf * 4, 3, False), "bn2": init_bn(ngf * 4),
        }
    dim = ngf * 4
    p["att_level1"] = [init_patblock(kg, dim, c)
                       for c in (False, True, True, True, True, True)]
    p["att_level2"] = [init_patblock(kg, dim, c) for c in (False, True, True, True)]
    p["att_level3"] = [init_patblock(kg, dim, c) for c in (False, True)]
    for name, cin, cout in (
        ("conv1_12_1", 512, 256), ("conv1_12_2", 768, 512),
        ("conv1_21_1", 512, 256), ("conv1_21_2", 768, 512),
        ("conv1_13_1", 512, 256), ("conv1_13_2", 768, 512),
        ("conv1_22_1", 768, 256), ("conv1_22_2", 1024, 512),
        ("conv1_31_1", 512, 256), ("conv1_31_2", 768, 512),
        ("conv1_14_1", 512, 256), ("conv1_14_2", 768, 512),
        ("conv1_23_1", 768, 256), ("conv1_23_2", 1024, 512),
        ("conv1_15_1", 512, 256), ("conv1_15_2", 768, 512),
    ):
        p[name] = init_conv(kg, cin, cout, 1, True)
    p["up_convT0"] = init_convT3(kg, ngf * 4, ngf * 2, False)
    p["up_bn0"] = init_bn(ngf * 2)
    p["up_convT1"] = init_convT3(kg, ngf * 2, ngf, False)
    p["up_bn1"] = init_bn(ngf)
    p["up_conv_final"] = init_conv(kg, ngf, output_nc, 7, True)
    return p


# ------------------------------ layer applies ------------------------------

def apply_conv(p, x, stride=1, padding=0, pad_mode="zeros", activation=None,
               out_dtype=jnp.bfloat16):
    k = p["k"]
    cout = p["cout"]
    N, H, W, C = x.shape
    if padding > 0:
        mode = "reflect" if pad_mode == "reflect" else "constant"
        x = jnp.pad(x, ((0, 0), (padding, padding), (padding, padding), (0, 0)),
                    mode=mode)
    Hp, Wp = x.shape[1], x.shape[2]
    Ho = (Hp - k) // stride + 1
    Wo = (Wp - k) // stride + 1
    # TODO(synk): im2col is XLA glue; an in-kernel (kh,kw) window walk over the
    # padded NHWC input would cut HBM traffic by ~k*k for the 7x7 / 3x3 convs.
    cols = []
    for kh in range(k):
        for kw in range(k):
            cols.append(x[:, kh:kh + stride * (Ho - 1) + 1:stride,
                          kw:kw + stride * (Wo - 1) + 1:stride, :])
    patches = cols[0] if len(cols) == 1 else jnp.concatenate(cols, axis=-1)
    a = patches.reshape(N * Ho * Wo, k * k * C)
    out = matmul_pallas(a, p["w"], p["b"], activation=activation,
                        out_dtype=out_dtype)
    if out.shape[1] != cout:
        out = out[:, :cout]                       # drop lane padding
    return out.reshape(N, Ho, Wo, cout)


def apply_convT2(p, x):
    # ConvTranspose2d(k=2, s=2): disjoint 2x2 output blocks.
    N, H, W, C = x.shape
    cout = p["cout"]
    a = x.reshape(N * H * W, C)
    out = matmul_pallas(a, p["w"], p["b"])
    out = out.reshape(N, H, W, 2, 2, cout).transpose(0, 1, 3, 2, 4, 5)
    return out.reshape(N, 2 * H, 2 * W, cout)


def apply_convT3(p, x):
    # ConvTranspose2d(k=3, s=2, p=1, output_padding=1) == zero-dilate + pad
    # (1 left/top, 2 right/bottom) + stride-1 3x3 conv (weights stored directly
    # in the equivalent direct-conv form).
    N, H, W, C = x.shape
    xd = jnp.zeros((N, 2 * H - 1, 2 * W - 1, C), x.dtype)
    xd = xd.at[:, ::2, ::2, :].set(x)
    xd = jnp.pad(xd, ((0, 0), (1, 2), (1, 2), (0, 0)))
    return apply_conv(p, xd, stride=1, padding=0)


def apply_bn(p, x, relu=False):
    N, H, W, C = x.shape
    y = batchnorm_pallas(x.reshape(N * H * W, C), p["gamma"], p["beta"], relu=relu)
    return y.reshape(N, H, W, C)


def patblock_forward(p, x1, x2):
    # conv_block_stream1: ReflPad(1) Conv3 BN ReLU ReflPad(1) Conv3 BN
    y1 = apply_conv(p["s1_conv1"], x1, padding=1, pad_mode="reflect")
    y1 = apply_bn(p["s1_bn1"], y1, relu=True)
    y1 = apply_conv(p["s1_conv2"], y1, padding=1, pad_mode="reflect")
    y1 = apply_bn(p["s1_bn2"], y1, relu=False)
    # conv_block_stream2 (cal_att=True): last conv, no norm
    y2 = apply_conv(p["s2_conv1"], x2, padding=1, pad_mode="reflect")
    y2 = apply_bn(p["s2_bn1"], y2, relu=True)
    y2 = apply_conv(p["s2_conv2"], y2, padding=1, pad_mode="reflect")

    N, H, W, C = y1.shape
    L = H * W
    q = apply_conv(p["query"], y1).reshape(N, L, C // 8)
    k = apply_conv(p["key"], y2).reshape(N, L, C // 8)
    v = apply_conv(p["value"], y1).reshape(N, L, C)
    att = attention_pallas(q, k, v)                                  # (N,L,C)
    x1_out = adin_residual_pallas(att, y1.reshape(N, L, C)).reshape(N, H, W, C)
    x2_out = jnp.concatenate([y2, x1_out], axis=-1)

    x1_down = apply_conv(p["s1_down"], x1_out, stride=2)
    x1_up = apply_convT2(p["s1_up"], x1_out)
    x2_down = apply_conv(p["s2_down"], x2_out, stride=2)
    x2_up = apply_convT2(p["s2_up"], x2_out)
    return x1_out, x2_out, x1_down, x1_up, x2_down, x2_up


def patn_forward(params, inputs):
    x1, x2 = inputs
    x1 = jnp.transpose(x1, (0, 2, 3, 1)).astype(jnp.bfloat16)   # NCHW -> NHWC
    x2 = jnp.transpose(x2, (0, 2, 3, 1)).astype(jnp.bfloat16)

    def down(p, x):
        x = apply_conv(p["conv0"], x, padding=3, pad_mode="reflect")
        x = apply_bn(p["bn0"], x, relu=True)
        x = apply_conv(p["conv1"], x, stride=2, padding=1)
        x = apply_bn(p["bn1"], x, relu=True)
        x = apply_conv(p["conv2"], x, stride=2, padding=1)
        x = apply_bn(p["bn2"], x, relu=True)
        return x

    x1 = down(params["s1_down"], x1)
    x2 = down(params["s2_down"], x2)

    L1, L2, L3 = params["att_level1"], params["att_level2"], params["att_level3"]

    def conv1(name, *xs):
        return apply_conv(params[name], jnp.concatenate(xs, axis=-1))

    x11_1, x11_2, x20_1, _, x20_2, _ = patblock_forward(L1[0], x1, x2)
    x12_1, x12_2, x12_1_down, _, x12_2_down, _ = patblock_forward(L1[1], x11_1, x11_2)
    x21_1, x21_2, x21_1_down, x21_1_up, x21_2_down, x21_2_up = patblock_forward(
        L2[0], x20_1, x20_2)

    x12_1 = conv1("conv1_12_1", x12_1, x21_1_up)
    x12_2 = conv1("conv1_12_2", x12_2, x21_2_up)
    x21_1 = conv1("conv1_21_1", x21_1, x12_1_down)
    x21_2 = conv1("conv1_21_2", x21_2, x12_2_down)

    x13_1, x13_2, x13_1_down, _, x13_2_down, _ = patblock_forward(L1[2], x12_1, x12_2)
    x22_1, x22_2, x22_1_down, x22_1_up, x22_2_down, x22_2_up = patblock_forward(
        L2[1], x21_1, x21_2)
    x31_1, x31_2, _, x31_1_up, _, x31_2_up = patblock_forward(
        L3[0], x21_1_down, x21_2_down)

    x13_1 = conv1("conv1_13_1", x13_1, x22_1_up)
    x13_2 = conv1("conv1_13_2", x13_2, x22_2_up)
    x22_1 = conv1("conv1_22_1", x22_1, x13_1_down, x31_1_up)
    x22_2 = conv1("conv1_22_2", x22_2, x13_2_down, x31_2_up)
    x31_1 = conv1("conv1_31_1", x31_1, x22_1_down)
    x31_2 = conv1("conv1_31_2", x31_2, x22_2_down)

    x14_1, x14_2, x14_1_down, _, x14_2_down, _ = patblock_forward(L1[3], x13_1, x13_2)
    x23_1, x23_2, _, x23_1_up, _, x23_2_up = patblock_forward(L2[2], x22_1, x22_2)
    _, _, _, x32_1_up, _, x32_2_up = patblock_forward(L3[1], x31_1, x31_2)

    x14_1 = conv1("conv1_14_1", x14_1, x23_1_up)
    x14_2 = conv1("conv1_14_2", x14_2, x23_2_up)
    x23_1 = conv1("conv1_23_1", x23_1, x14_1_down, x32_1_up)
    # NOTE: the reference uses x31_2_up here (not x32_2_up) — reproduced as-is.
    x23_2 = conv1("conv1_23_2", x23_2, x14_2_down, x31_2_up)

    x15_1, x15_2, _, _, _, _ = patblock_forward(L1[4], x14_1, x14_2)
    _, _, _, x24_1_up, _, x24_2_up = patblock_forward(L2[3], x23_1, x23_2)

    x15_1 = conv1("conv1_15_1", x15_1, x24_1_up)
    x15_2 = conv1("conv1_15_2", x15_2, x24_2_up)

    # NOTE: the reference reuses att_level1[4] here (not [5]) — reproduced as-is.
    x16_1, x16_2, _, _, _, _ = patblock_forward(L1[4], x15_1, x15_2)

    y = apply_convT3(params["up_convT0"], x16_1)
    y = apply_bn(params["up_bn0"], y, relu=True)
    y = apply_convT3(params["up_convT1"], y)
    y = apply_bn(params["up_bn1"], y, relu=True)
    y = apply_conv(params["up_conv_final"], y, padding=3, pad_mode="reflect",
                   activation="tanh", out_dtype=jnp.float32)
    return jnp.transpose(y, (0, 3, 1, 2))   # NHWC -> NCHW


# ----------------------------------- main -----------------------------------

if __name__ == "__main__":
    key = jax.random.PRNGKey(0)
    pkey, k1, k2 = jax.random.split(key, 3)

    input_nc = [3, 3]
    output_nc = 3
    ngf = 64
    N, H, W = 1, 32, 32     # spatial chosen so level3 features are 2x2 (valid var)

    params = init_patn(pkey, input_nc, output_nc, ngf)

    x1 = jax.random.normal(k1, (N, input_nc[0], H, W), jnp.float32)   # NCHW inputs
    x2 = jax.random.normal(k2, (N, input_nc[1], H, W), jnp.float32)

    out = patn_forward(params, (x1, x2))
    out = jax.block_until_ready(out)

    assert out.shape == (N, output_nc, H, W), out.shape
    assert bool(jnp.all(jnp.isfinite(out)))
    print("KERNEL_OK")
</pallas_src>

<mosaic_0001>
module attributes {stable_mosaic.version = 11 : i64} {
  func.func @kernel(%arg0: i32, %arg1: i32, %arg2: i32, %arg3: memref<256x256xbf16, #tpu.memory_space<vmem>>, %arg4: memref<256x128xbf16, #tpu.memory_space<vmem>>, %arg5: memref<1x128xf32, #tpu.memory_space<vmem>>, %arg6: memref<256x128xbf16, #tpu.memory_space<vmem>>, %arg7: memref<256x128xf32, #tpu.memory_space<vmem>>) attributes {dimension_semantics = [#tpu.dimension_semantics<parallel>, #tpu.dimension_semantics<parallel>, #tpu.dimension_semantics<arbitrary>], iteration_bounds = array<i64: 4, 1, 1>, scalar_prefetch = 0 : i64, scratch_operands = 1 : i64, tpu.core_type = #tpu.core_type<tc>, window_params = [{transform_indices = @transform_0, window_bounds = array<i64: 256, 256>}, {transform_indices = @transform_1, window_bounds = array<i64: 256, 128>}, {transform_indices = @transform_2, window_bounds = array<i64: 1, 128>}, {transform_indices = @transform_3, window_bounds = array<i64: 256, 128>}]} {
    %c0_i32 = arith.constant 0 : i32
    %0 = arith.cmpi eq, %arg2, %c0_i32 : i32
    %1 = arith.extui %0 : i1 to i32
    %c0_i32_0 = arith.constant 0 : i32
    %2 = arith.cmpi ne, %1, %c0_i32_0 : i32
    scf.if %2 {
      %cst_10 = arith.constant 0.000000e+00 : f32
      %12 = vector.broadcast %cst_10 : f32 to vector<256x128xf32>
      %c0_11 = arith.constant 0 : index
      %c0_12 = arith.constant 0 : index
      %13 = vector.load %arg7[%c0_11, %c0_12] : memref<256x128xf32, #tpu.memory_space<vmem>>, vector<256x128xf32>
      tpu.vector_store %arg7[%c0_11, %c0_12], %12 {strides = array<i32>} : memref<256x128xf32, #tpu.memory_space<vmem>>, vector<256x128xf32>,
    } else {
    }
    %c0 = arith.constant 0 : index
    %c0_1 = arith.constant 0 : index
    %3 = vector.load %arg7[%c0, %c0_1] : memref<256x128xf32, #tpu.memory_space<vmem>>, vector<256x128xf32>
    %c0_2 = arith.constant 0 : index
    %c0_3 = arith.constant 0 : index
    %4 = vector.load %arg3[%c0_2, %c0_3] : memref<256x256xbf16, #tpu.memory_space<vmem>>, vector<256x256xbf16>
    %c0_4 = arith.constant 0 : index
    %c0_5 = arith.constant 0 : index
    %5 = vector.load %arg4[%c0_4, %c0_5] : memref<256x128xbf16, #tpu.memory_space<vmem>>, vector<256x128xbf16>
    %cst = arith.constant dense<0.000000e+00> : vector<256x128xf32>
    %6 = tpu.matmul %4, %5, %cst {dimension_numbers = #tpu.dot_dimension_numbers<[1], [0], [0], [1], [0, 0, 1, 1], [], []>} : vector<256x256xbf16>, vector<256x128xbf16>, vector<256x128xf32> -> vector<256x128xf32>
    %7 = arith.addf %3, %6 : vector<256x128xf32>
    %c0_6 = arith.constant 0 : index
    %c0_7 = arith.constant 0 : index
    %8 = vector.load %arg7[%c0_6, %c0_7] : memref<256x128xf32, #tpu.memory_space<vmem>>, vector<256x128xf32>
    tpu.vector_store %arg7[%c0_6, %c0_7], %7 {strides = array<i32>} : memref<256x128xf32, #tpu.memory_space<vmem>>, vector<256x128xf32>,
    %c0_i32_8 = arith.constant 0 : i32
    %9 = arith.cmpi eq, %arg2, %c0_i32_8 : i32
    %10 = arith.extui %9 : i1 to i32
    %c0_i32_9 = arith.constant 0 : i32
    %11 = arith.cmpi ne, %10, %c0_i32_9 : i32
    scf.if %11 {
      %c0_10 = arith.constant 0 : index
      %c0_11 = arith.constant 0 : index
      %12 = vector.load %arg7[%c0_10, %c0_11] : memref<256x128xf32, #tpu.memory_space<vmem>>, vector<256x128xf32>
      %c0_12 = arith.constant 0 : index
      %c0_13 = arith.constant 0 : index
      %13 = vector.load %arg5[%c0_12, %c0_13] : memref<1x128xf32, #tpu.memory_space<vmem>>, vector<1x128xf32>
      %14 = vector.broadcast %13 : vector<1x128xf32> to vector<256x128xf32>
      %15 = arith.addf %12, %14 : vector<256x128xf32>
      %16 = arith.truncf %15 : vector<256x128xf32> to vector<256x128xbf16>
      %c0_14 = arith.constant 0 : index
      %c0_15 = arith.constant 0 : index
      %17 = vector.load %arg6[%c0_14, %c0_15] : memref<256x128xbf16, #tpu.memory_space<vmem>>, vector<256x128xbf16>
      tpu.vector_store %arg6[%c0_14, %c0_15], %16 {strides = array<i32>} : memref<256x128xbf16, #tpu.memory_space<vmem>>, vector<256x128xbf16>,
    } else {
    }
    return
  }
  func.func @transform_0(%arg0: i32, %arg1: i32, %arg2: i32) -> (i32, i32) {
    %c0_i32 = arith.constant 0 : i32
    return %arg0, %arg2 : i32, i32
  }
  func.func @transform_1(%arg0: i32, %arg1: i32, %arg2: i32) -> (i32, i32) {
    %c0_i32 = arith.constant 0 : i32
    return %arg2, %arg1 : i32, i32
  }
  func.func @transform_2(%arg0: i32, %arg1: i32, %arg2: i32) -> (i32, i32) {
    %c0_i32 = arith.constant 0 : i32
    %c0_i32_0 = arith.constant 0 : i32
    return %c0_i32, %arg1 : i32, i32
  }
  func.func @transform_3(%arg0: i32, %arg1: i32, %arg2: i32) -> (i32, i32) {
    %c0_i32 = arith.constant 0 : i32
    return %arg0, %arg1 : i32, i32
  }
}

</mosaic_0001>

<llo_original>
// kernel: matmul_pallas.1
$region0: #{matmul_pallas.1}
  #allocation0 [shape = 'u32[]', space=smem, size = 0x4, offset = 0x4, fixed_abs, tag = 'smem constant byte address 0x4 - core index']
  #allocation1 [shape = 'u32[72,128]{1,0:T(1,128)}', space=vmem, size = 0x9000, scoped, tag = 'internal scratch']
  #allocation2 [shape = 'f32[256,128]{1,0:T(8,128)}', space=vmem, size = 0x20000, scoped, tag = 'scratch operand']
  %s0 = inlined_call_operand.vmem [shape: bf16[1024,256], index: 0, kind: input, shape index: {}]
  %s1 = inlined_call_operand.vmem [shape: bf16[256,128], index: 1, kind: input, shape index: {}]
  %s2 = inlined_call_operand.vmem [shape: f32[1,128], index: 2, kind: input, shape index: {}]
  %s3 = inlined_call_operand.hbm [shape: bf16[1024,128], index: 3, kind: output, shape index: {}]
  %s4 = sld [smem:[#allocation0]]
  $region53: #{matmul_pallas.1} parent=0
    _
  %s6 = ssub.s32 1, %s4
  %s7 = scalar_select 0, %s6, %s4
  $region1: #{matmul_pallas.1} parent=0
    #allocation3 [shape = 'u8[131072]{0}', space=vmem, size = 0x20000, scoped, tag = 'output window, operand 0']
    #allocation4 [shape = 's32[2]{0}', space=sflag, size = 0x8, scoped, tag = 'scoped memory for matmul_pallas.1']
    %8 = vsyncpa [#allocation4], 0
    %s9 = scalar_lea.sflag [#allocation4], 1
    %10 = vsyncpa %s9, 0
    loop: start=0, step=1, limit=6
    $region2: #{matmul_pallas.1} parent=1 // loop_pre_header
      _
    $region3: #{matmul_pallas.1} parent=1 // loop_header
      %s12 = sphi 0, %s16
      %p13 = scmp.ge.s32.totalorder %s12, 6
      %s19 = sphi 0, %s38
      %s20 = sphi 0, %s34
      %s21 = sphi 0, %s30
      %s22 = sphi 0, %s19
      %s23 = sphi 0, %s20
      %s24 = sphi 0, %s21
      %s25 = sphi 0, %s22
      %s26 = sphi 0, %s23
      %s27 = sphi 0, %s24
      %s43 = sphi 0, %s45
      %s46 = sphi 0, %s43
      %s47 = sphi 0, %s46
      %s63 = sphi 0, %s47
      %s71 = sphi 0, %s73
      %s74 = sphi 0, %s71
      %s75 = sphi 0, %s74
      %s91 = sphi 0, %s75
      %s97 = sphi 0, %s99
      %s100 = sphi 0, %s97
      %s101 = sphi 0, %s100
      %s117 = sphi 0, %s101
      %s125 = sphi 0, %s127
      %s128 = sphi 0, %s125
      %s129 = sphi 0, %s128
      %s145 = sphi 0, %s129
    $region4: #{matmul_pallas.1} parent=1 // loop_header_branch
      %15 = sbr.rel (%p13) target = $region8
    $region5: #{matmul_pallas.1} parent=1 // loop_body
      %s17 = ssub.s32 %s12, 1
      %s18 = ssub.s32 %s12, 2
      %s28 = sadd.s32 1, %s21
      %p29 = scmp.ge.s32.totalorder %s28, 1
      %s30 = scalar_select %p29, 0, %s28
      %s31 = sadd.s32 1, %s20
      %s32 = scalar_select %p29, %s31, %s20
      %p33 = scmp.ge.s32.totalorder %s32, 1
      %s34 = scalar_select %p33, 0, %s32
      %s35 = sadd.s32 1, %s19
      %s36 = scalar_select %p33, %s35, %s19
      %p37 = scmp.ge.s32.totalorder %s36, 4
      %s38 = scalar_select %p37, 0, %s36
      %s39 = ssub.s32 %s19, %s38
      %s40 = ssub.s32 %s21, %s30
      %s41 = sor.u32 %s39, %s40
      %p42 = scmp.eq.s32.totalorder %s41, 0
      %s44 = sadd.s32 %s43, 1
      %s45 = scalar_select %p42, %s43, %s44
      %p48 = pneg %p42
      %p49 = scmp.eq.s32.totalorder %s12, 3
      %p50 = por %p48, %p49
      %p51 = scmp.ne.s32.totalorder %s43, %s46
      %p52 = scmp.eq.s32.totalorder %s12, 0
      %p53 = por %p51, %p52
      %p54 = scmp.ne.s32.totalorder %s43, %s46
      %p55 = scmp.eq.s32.totalorder %s17, 3
      %p56 = por %p54, %p55
      %p57 = scmp.ne.s32.totalorder %s46, %s47
      %p58 = scmp.eq.s32.totalorder %s17, 0
      %p59 = por %p57, %p58
      %p60 = scmp.ne.s32.totalorder %s46, %s47
      %p61 = scmp.eq.s32.totalorder %s18, 3
      %p62 = por %p60, %p61
      %p64 = scmp.ne.s32.totalorder %s47, %s63
      %p65 = scmp.eq.s32.totalorder %s18, 0
      %p66 = por %p64, %p65
      %s67 = ssub.s32 %s21, %s30
      %s68 = ssub.s32 %s20, %s34
      %s69 = sor.u32 %s67, %s68
      %p70 = scmp.eq.s32.totalorder %s69, 0
      %s72 = sadd.s32 %s71, 1
      %s73 = scalar_select %p70, %s71, %s72
      %p76 = pneg %p70
      %p77 = scmp.eq.s32.totalorder %s12, 3
      %p78 = por %p76, %p77
      %p79 = scmp.ne.s32.totalorder %s71, %s74
      %p80 = scmp.eq.s32.totalorder %s12, 0
      %p81 = por %p79, %p80
      %p82 = scmp.ne.s32.totalorder %s71, %s74
      %p83 = scmp.eq.s32.totalorder %s17, 3
      %p84 = por %p82, %p83
      %p85 = scmp.ne.s32.totalorder %s74, %s75
      %p86 = scmp.eq.s32.totalorder %s17, 0
      %p87 = por %p85, %p86
      %p88 = scmp.ne.s32.totalorder %s74, %s75
      %p89 = scmp.eq.s32.totalorder %s18, 3
      %p90 = por %p88, %p89
      %p92 = scmp.ne.s32.totalorder %s75, %s91
      %p93 = scmp.eq.s32.totalorder %s18, 0
      %p94 = por %p92, %p93
      %s95 = ssub.s32 %s20, %s34
      %p96 = scmp.eq.s32.totalorder %s95, 0
      %s98 = sadd.s32 %s97, 1
      %s99 = scalar_select %p96, %s97, %s98
      %p102 = pneg %p96
      %p103 = scmp.eq.s32.totalorder %s12, 3
      %p104 = por %p102, %p103
      %p105 = scmp.ne.s32.totalorder %s97, %s100
      %p106 = scmp.eq.s32.totalorder %s12, 0
      %p107 = por %p105, %p106
      %p108 = scmp.ne.s32.totalorder %s97, %s100
      %p109 = scmp.eq.s32.totalorder %s17, 3
      %p110 = por %p108, %p109
      %p111 = scmp.ne.s32.totalorder %s100, %s101
      %p112 = scmp.eq.s32.totalorder %s17, 0
      %p113 = por %p111, %p112
      %p114 = scmp.ne.s32.totalorder %s100, %s101
      %p115 = scmp.eq.s32.totalorder %s18, 3
      %p116 = por %p114, %p115
      %p118 = scmp.ne.s32.totalorder %s101, %s117
      %p119 = scmp.eq.s32.totalorder %s18, 0
      %p120 = por %p118, %p119
      %s121 = ssub.s32 %s19, %s38
      %s122 = ssub.s32 %s20, %s34
      %s123 = sor.u32 %s121, %s122
      %p124 = scmp.eq.s32.totalorder %s123, 0
      %s126 = sadd.s32 %s125, 1
      %s127 = scalar_select %p124, %s125, %s126
      %p130 = pneg %p124
      %p131 = scmp.eq.s32.totalorder %s12, 3
      %p132 = por %p130, %p131
      %p133 = scmp.ne.s32.totalorder %s125, %s128
      %p134 = scmp.eq.s32.totalorder %s12, 0
      %p135 = por %p133, %p134
      %p136 = scmp.ne.s32.totalorder %s125, %s128
      %p137 = scmp.eq.s32.totalorder %s17, 3
      %p138 = por %p136, %p137
      %p139 = scmp.ne.s32.totalorder %s128, %s129
      %p140 = scmp.eq.s32.totalorder %s17, 0
      %p141 = por %p139, %p140
      %p142 = scmp.ne.s32.totalorder %s128, %s129
      %p143 = scmp.eq.s32.totalorder %s18, 3
      %p144 = por %p142, %p143
      %p146 = scmp.ne.s32.totalorder %s129, %s145
      %p147 = scmp.eq.s32.totalorder %s18, 0
      %p148 = por %p146, %p147
      %p149 = scmp.le.s32.totalorder 1, %s12
      %p150 = scmp.lt.s32.totalorder %s12, 5
      %p151 = pnand %p149, %p150
      %p152 = pneg %p151
      // Predicated region
      $region9: #{matmul_pallas.1} parent=5 // pred_check
        _
      $region10: #{matmul_pallas.1} parent=5 // pred_check_branch
        %154 = sbr.rel (%p151) target = $region12
      $region11: #{matmul_pallas.1} parent=5 // pred_region
        %s155 = ssub.s32 %s12, 1
        // Predicated region
        $region13: #{matmul_pallas.1} parent=11 // pred_check
          %p156 = pneg %p87
        $region14: #{matmul_pallas.1} parent=11 // pred_check_branch
          %158 = sbr.rel (%p156) target = $region16
        $region15: #{matmul_pallas.1} parent=11 // pred_region
          %s159 = smul.u32 32, %s24
          %p160 = scmp.lt.s32.totalorder %s159, 31
          %s161 = scalar_select %p160, %s159, 31
          %p162 = scmp.lt.s32.totalorder %s23, 0
          %s163 = scalar_select %p162, %s23, 0
          %s164 = sadd.s32 %s163, %s161
          %s165 = smul.addr %s164, 4
          %s166 = scalar_lea.vmem %s1, %s165
          %s167 = smul.u32 32, %s24
        $region16: #{matmul_pallas.1} parent=11 // pred_fallthru
          _
        // Predicated region
        $region17: #{matmul_pallas.1} parent=11 // pred_check
          %p168 = pneg %p113
        $region18: #{matmul_pallas.1} parent=11 // pred_check_branch
          %170 = sbr.rel (%p168) target = $region20
        $region19: #{matmul_pallas.1} parent=11 // pred_region
          %p171 = scmp.lt.s32.totalorder %s23, 0
          %s172 = scalar_select %p171, %s23, 0
          %s173 = scalar_lea.vmem %s2, %s172
        $region20: #{matmul_pallas.1} parent=11 // pred_fallthru
          _
      $region12: #{matmul_pallas.1} parent=5 // pred_fallthru
        _
      %p174 = scmp.lt.s32.totalorder %s12, 4
      // Predicated region
      $region21: #{matmul_pallas.1} parent=5 // pred_check
        %p175 = pneg %p174
      $region22: #{matmul_pallas.1} parent=5 // pred_check_branch
        %177 = sbr.rel (%p175) target = $region24
      $region23: #{matmul_pallas.1} parent=5 // pred_region
        // Predicated region
        $region25: #{matmul_pallas.1} parent=23 // pred_check
          %p178 = pneg %p53
        $region26: #{matmul_pallas.1} parent=23 // pred_check_branch
          %180 = sbr.rel (%p178) target = $region28
        $region27: #{matmul_pallas.1} parent=23 // pred_region
          %s181 = smul.u32 32, %s19
          %s182 = smul.u32 2, %s21
          %p183 = scmp.lt.s32.totalorder %s181, 127
          %s184 = scalar_select %p183, %s181, 127
          %p185 = scmp.lt.s32.totalorder %s182, 1
          %s186 = scalar_select %p185, %s182, 1
          %s187 = smul.addr %s184, 2
          %s188 = sadd.s32 %s186, %s187
          %s189 = smul.addr %s188, 4
          %s190 = scalar_lea.vmem %s0, %s189
          %s191 = smul.u32 32, %s19
          %s192 = smul.u32 2, %s21
        $region28: #{matmul_pallas.1} parent=23 // pred_fallthru
          _
      $region24: #{matmul_pallas.1} parent=5 // pred_fallthru
        _
      %p193 = scmp.le.s32.totalorder 1, %s12
      %p194 = scmp.lt.s32.totalorder %s12, 5
      %p195 = pnand %p193, %p194
      %p196 = pneg %p195
      // Predicated region
      $region29: #{matmul_pallas.1} parent=5 // pred_check
        _
      $region30: #{matmul_pallas.1} parent=5 // pred_check_branch
        %198 = sbr.rel (%p195) target = $region32
      $region31: #{matmul_pallas.1} parent=5 // pred_region
        %s199 = ssub.s32 %s12, 1
        %s200 = smul.u32 32, %s22
        %s201 = smul.u32 2, %s24
        %p202 = scmp.lt.s32.totalorder %s200, 127
        %s203 = scalar_select %p202, %s200, 127
        %p204 = scmp.lt.s32.totalorder %s201, 1
        %s205 = scalar_select %p204, %s201, 1
        %s206 = smul.addr %s203, 2
        %s207 = sadd.s32 %s205, %s206
        %s208 = smul.addr %s207, 4
        %s209 = scalar_lea.vmem %s0, %s208
        %p210 = pneg %p59
        %p211 = pneg %p56
        %s212 = smul.u32 32, %s24
        %p213 = scmp.lt.s32.totalorder %s212, 31
        %s214 = scalar_select %p213, %s212, 31
        %p215 = scmp.lt.s32.totalorder %s23, 0
        %s216 = scalar_select %p215, %s23, 0
        %s217 = sadd.s32 %s216, %s214
        %s218 = smul.addr %s217, 4
        %s219 = scalar_lea.vmem %s1, %s218
        %p220 = pneg %p87
        %p221 = pneg %p84
        %p222 = scmp.lt.s32.totalorder %s23, 0
        %s223 = scalar_select %p222, %s23, 0
        %s224 = scalar_lea.vmem %s2, %s223
        %p225 = pneg %p113
        %p226 = pneg %p110
        %p227 = pneg %p141
        %p228 = pneg %p138
        %s229 = sand.u32 %s128, 1
        %s230 = scalar_lea.sflag [#allocation4], %s229
        %s231 = sand.u32 %s128, 1
        %s232 = smul.addr %s231, 128
        %s233 = scalar_lea.vmem [#allocation3], %s232
        %s234 = smul.u32 32, %s22
        %s235 = smul.u32 2, %s24
        %p236 = scmp.lt.s32.totalorder %s234, 127
        %s237 = scalar_select %p236, %s234, 127
        %p238 = scmp.lt.s32.totalorder %s235, 1
        %s239 = scalar_select %p238, %s235, 1
        %s240 = smul.addr %s237, 2
        %s241 = sadd.s32 %s239, %s240
        %s242 = smul.addr %s241, 4
        %s243 = scalar_lea.vmem %s0, %s242
        %s244 = smul.u32 32, %s22
        %s245 = smul.u32 2, %s24
        %s246 = smul.u32 32, %s24
        %p247 = scmp.lt.s32.totalorder %s246, 31
        %s248 = scalar_select %p247, %s246, 31
        %p249 = scmp.lt.s32.totalorder %s23, 0
        %s250 = scalar_select %p249, %s23, 0
        %s251 = sadd.s32 %s250, %s248
        %s252 = smul.addr %s251, 4
        %s253 = scalar_lea.vmem %s1, %s252
        %s254 = smul.u32 32, %s24
        %p255 = scmp.lt.s32.totalorder %s23, 0
        %s256 = scalar_select %p255, %s23, 0
        %s257 = scalar_lea.vmem %s2, %s256
        %s258 = smul.u32 32, %s22
        %p259 = scmp.eq.s32.totalorder %s24, 0
        // Predicated region
        $region33: #{matmul_pallas.1} parent=31 // pred_check
          %p260 = pneg %p259
        $region34: #{matmul_pallas.1} parent=31 // pred_check_branch
          %262 = sbr.rel (%p260) target = $region36
        $region35: #{matmul_pallas.1} parent=31 // pred_region
          %263 = vst [vmem:[#allocation2] sm:$0xff] 0.0
          %264 = vst [vmem:[#allocation2 + $0x8] sm:$0xff] 0.0
          %265 = vst [vmem:[#allocation2 + $0x10] sm:$0xff] 0.0
          %266 = vst [vmem:[#allocation2 + $0x18] sm:$0xff] 0.0
          %267 = vst [vmem:[#allocation2 + $0x20] sm:$0xff] 0.0
          %268 = vst [vmem:[#allocation2 + $0x28] sm:$0xff] 0.0
          %269 = vst [vmem:[#allocation2 + $0x30] sm:$0xff] 0.0
          %270 = vst [vmem:[#allocation2 + $0x38] sm:$0xff] 0.0
          %271 = vst [vmem:[#allocation2 + $0x40] sm:$0xff] 0.0
          %272 = vst [vmem:[#allocation2 + $0x48] sm:$0xff] 0.0
          %273 = vst [vmem:[#allocation2 + $0x50] sm:$0xff] 0.0
          %274 = vst [vmem:[#allocation2 + $0x58] sm:$0xff] 0.0
          %275 = vst [vmem:[#allocation2 + $0x60] sm:$0xff] 0.0
          %276 = vst [vmem:[#allocation2 + $0x68] sm:$0xff] 0.0
          %277 = vst [vmem:[#allocation2 + $0x70] sm:$0xff] 0.0
          %278 = vst [vmem:[#allocation2 + $0x78] sm:$0xff] 0.0
          %279 = vst [vmem:[#allocation2 + $0x80] sm:$0xff] 0.0
          %280 = vst [vmem:[#allocation2 + $0x88] sm:$0xff] 0.0
          %281 = vst [vmem:[#allocation2 + $0x90] sm:$0xff] 0.0
          %282 = vst [vmem:[#allocation2 + $0x98] sm:$0xff] 0.0
          %283 = vst [vmem:[#allocation2 + $0xa0] sm:$0xff] 0.0
          %284 = vst [vmem:[#allocation2 + $0xa8] sm:$0xff] 0.0
          %285 = vst [vmem:[#allocation2 + $0xb0] sm:$0xff] 0.0
          %286 = vst [vmem:[#allocation2 + $0xb8] sm:$0xff] 0.0
          %287 = vst [vmem:[#allocation2 + $0xc0] sm:$0xff] 0.0
          %288 = vst [vmem:[#allocation2 + $0xc8] sm:$0xff] 0.0
          %289 = vst [vmem:[#allocation2 + $0xd0] sm:$0xff] 0.0
          %290 = vst [vmem:[#allocation2 + $0xd8] sm:$0xff] 0.0
          %291 = vst [vmem:[#allocation2 + $0xe0] sm:$0xff] 0.0
          %292 = vst [vmem:[#allocation2 + $0xe8] sm:$0xff] 0.0
          %293 = vst [vmem:[#allocation2 + $0xf0] sm:$0xff] 0.0
          %294 = vst [vmem:[#allocation2 + $0xf8] sm:$0xff] 0.0
        $region36: #{matmul_pallas.1} parent=31 // pred_fallthru
          _
        %v295 = vld [vmem:[#allocation2] sm:$0xff]
        %v296 = vld [vmem:[#allocation2 + $0x8] sm:$0xff]
        %v297 = vld [vmem:[#allocation2 + $0x10] sm:$0xff]
        %v298 = vld [vmem:[#allocation2 + $0x18] sm:$0xff]
        %v299 = vld [vmem:[#allocation2 + $0x20] sm:$0xff]
        %v300 = vld [vmem:[#allocation2 + $0x28] sm:$0xff]
        %v301 = vld [vmem:[#allocation2 + $0x30] sm:$0xff]
        %v302 = vld [vmem:[#allocation2 + $0x38] sm:$0xff]
        %v303 = vld [vmem:[#allocation2 + $0x40] sm:$0xff]
        %v304 = vld [vmem:[#allocation2 + $0x48] sm:$0xff]
        %v305 = vld [vmem:[#allocation2 + $0x50] sm:$0xff]
        %v306 = vld [vmem:[#allocation2 + $0x58] sm:$0xff]
        %v307 = vld [vmem:[#allocation2 + $0x60] sm:$0xff]
        %v308 = vld [vmem:[#allocation2 + $0x68] sm:$0xff]
        %v309 = vld [vmem:[#allocation2 + $0x70] sm:$0xff]
        %v310 = vld [vmem:[#allocation2 + $0x78] sm:$0xff]
        %v311 = vld [vmem:[#allocation2 + $0x80] sm:$0xff]
        %v312 = vld [vmem:[#allocation2 + $0x88] sm:$0xff]
        %v313 = vld [vmem:[#allocation2 + $0x90] sm:$0xff]
        %v314 = vld [vmem:[#allocation2 + $0x98] sm:$0xff]
        %v315 = vld [vmem:[#allocation2 + $0xa0] sm:$0xff]
        %v316 = vld [vmem:[#allocation2 + $0xa8] sm:$0xff]
        %v317 = vld [vmem:[#allocation2 + $0xb0] sm:$0xff]
        %v318 = vld [vmem:[#allocation2 + $0xb8] sm:$0xff]
        %v319 = vld [vmem:[#allocation2 + $0xc0] sm:$0xff]
        %v320 = vld [vmem:[#allocation2 + $0xc8] sm:$0xff]
        %v321 = vld [vmem:[#allocation2 + $0xd0] sm:$0xff]
        %v322 = vld [vmem:[#allocation2 + $0xd8] sm:$0xff]
        %v323 = vld [vmem:[#allocation2 + $0xe0] sm:$0xff]
        %v324 = vld [vmem:[#allocation2 + $0xe8] sm:$0xff]
        %v325 = vld [vmem:[#allocation2 + $0xf0] sm:$0xff]
        %v326 = vld [vmem:[#allocation2 + $0xf8] sm:$0xff]
        %v327 = vld [vmem:[%s243] sm:$0xff]
        %v328 = vld [vmem:[%s243 + $0x8] sm:$0xff]
        %v329 = vld [vmem:[%s243 + $0x10] sm:$0xff]
        %v330 = vld [vmem:[%s243 + $0x18] sm:$0xff]
        %v331 = vld [vmem:[%s243 + $0x20] sm:$0xff]
        %v332 = vld [vmem:[%s243 + $0x28] sm:$0xff]
        %v333 = vld [vmem:[%s243 + $0x30] sm:$0xff]
        %v334 = vld [vmem:[%s243 + $0x38] sm:$0xff]
        %v335 = vld [vmem:[%s243 + $0x40] sm:$0xff]
        %v336 = vld [vmem:[%s243 + $0x48] sm:$0xff]
        %v337 = vld [vmem:[%s243 + $0x50] sm:$0xff]
        %v338 = vld [vmem:[%s243 + $0x58] sm:$0xff]
        %v339 = vld [vmem:[%s243 + $0x60] sm:$0xff]
        %v340 = vld [vmem:[%s243 + $0x68] sm:$0xff]
        %v341 = vld [vmem:[%s243 + $0x70] sm:$0xff]
        %v342 = vld [vmem:[%s243 + $0x78] sm:$0xff]
        %v343 = vld [vmem:[%s243 + $0x80] sm:$0xff]
        %v344 = vld [vmem:[%s243 + $0x88] sm:$0xff]
        %v345 = vld [vmem:[%s243 + $0x90] sm:$0xff]
        %v346 = vld [vmem:[%s243 + $0x98] sm:$0xff]
        %v347 = vld [vmem:[%s243 + $0xa0] sm:$0xff]
        %v348 = vld [vmem:[%s243 + $0xa8] sm:$0xff]
        %v349 = vld [vmem:[%s243 + $0xb0] sm:$0xff]
        %v350 = vld [vmem:[%s243 + $0xb8] sm:$0xff]
        %v351 = vld [vmem:[%s243 + $0xc0] sm:$0xff]
        %v352 = vld [vmem:[%s243 + $0xc8] sm:$0xff]
        %v353 = vld [vmem:[%s243 + $0xd0] sm:$0xff]
        %v354 = vld [vmem:[%s243 + $0xd8] sm:$0xff]
        %v355 = vld [vmem:[%s243 + $0xe0] sm:$0xff]
        %v356 = vld [vmem:[%s243 + $0xe8] sm:$0xff]
        %v357 = vld [vmem:[%s243 + $0xf0] sm:$0xff]
        %v358 = vld [vmem:[%s243 + $0xf8] sm:$0xff]
        %v359 = vld [vmem:[%s253] sm:$0xf]
        %v360 = vld [vmem:[%s253 + $0x4] sm:$0xf]
        %v361 = vld [vmem:[%s253 + $0x8] sm:$0xf]
        %v362 = vld [vmem:[%s253 + $0xc] sm:$0xf]
        %v363 = vld [vmem:[%s253 + $0x10] sm:$0xf]
        %v364 = vld [vmem:[%s253 + $0x14] sm:$0xf]
        %v365 = vld [vmem:[%s253 + $0x18] sm:$0xf]
        %v366 = vld [vmem:[%s253 + $0x1c] sm:$0xf]
        %v367 = vld [vmem:[%s253 + $0x20] sm:$0xf]
        %v368 = vld [vmem:[%s253 + $0x24] sm:$0xf]
        %v369 = vld [vmem:[%s253 + $0x28] sm:$0xf]
        %v370 = vld [vmem:[%s253 + $0x2c] sm:$0xf]
        %v371 = vld [vmem:[%s253 + $0x30] sm:$0xf]
        %v372 = vld [vmem:[%s253 + $0x34] sm:$0xf]
        %v373 = vld [vmem:[%s253 + $0x38] sm:$0xf]
        %v374 = vld [vmem:[%s253 + $0x3c] sm:$0xf]
        %v375 = vld [vmem:[%s253 + $0x40] sm:$0xf]
        %v376 = vld [vmem:[%s253 + $0x44] sm:$0xf]
        %v377 = vld [vmem:[%s253 + $0x48] sm:$0xf]
        %v378 = vld [vmem:[%s253 + $0x4c] sm:$0xf]
        %v379 = vld [vmem:[%s253 + $0x50] sm:$0xf]
        %v380 = vld [vmem:[%s253 + $0x54] sm:$0xf]
        %v381 = vld [vmem:[%s253 + $0x58] sm:$0xf]
        %v382 = vld [vmem:[%s253 + $0x5c] sm:$0xf]
        %v383 = vld [vmem:[%s253 + $0x60] sm:$0xf]
        %v384 = vld [vmem:[%s253 + $0x64] sm:$0xf]
        %v385 = vld [vmem:[%s253 + $0x68] sm:$0xf]
        %v386 = vld [vmem:[%s253 + $0x6c] sm:$0xf]
        %v387 = vld [vmem:[%s253 + $0x70] sm:$0xf]
        %v388 = vld [vmem:[%s253 + $0x74] sm:$0xf]
        %v389 = vld [vmem:[%s253 + $0x78] sm:$0xf]
        %v390 = vld [vmem:[%s253 + $0x7c] sm:$0xf]
        %v423 = vunpack.c.l.b16 %v327
        %v424 = vunpack.c.h.b16 %v327
        %v425 = vunpack.c.l.b16 %v328
        %v426 = vunpack.c.h.b16 %v328
        %v427 = vunpack.c.l.b16 %v329
        %v428 = vunpack.c.h.b16 %v329
        %v429 = vunpack.c.l.b16 %v330
        %v430 = vunpack.c.h.b16 %v330
        %v431 = vunpack.c.l.b16 %v331
        %v432 = vunpack.c.h.b16 %v331
        %v433 = vunpack.c.l.b16 %v332
        %v434 = vunpack.c.h.b16 %v332
        %v435 = vunpack.c.l.b16 %v333
        %v436 = vunpack.c.h.b16 %v333
        %v437 = vunpack.c.l.b16 %v334
        %v438 = vunpack.c.h.b16 %v334
        %v439 = vunpack.c.l.b16 %v335
        %v440 = vunpack.c.h.b16 %v335
        %v441 = vunpack.c.l.b16 %v336
        %v442 = vunpack.c.h.b16 %v336
        %v443 = vunpack.c.l.b16 %v337
        %v444 = vunpack.c.h.b16 %v337
        %v445 = vunpack.c.l.b16 %v338
        %v446 = vunpack.c.h.b16 %v338
        %v447 = vunpack.c.l.b16 %v339
        %v448 = vunpack.c.h.b16 %v339
        %v449 = vunpack.c.l.b16 %v340
        %v450 = vunpack.c.h.b16 %v340
        %v451 = vunpack.c.l.b16 %v341
        %v452 = vunpack.c.h.b16 %v341
        %v453 = vunpack.c.l.b16 %v342
        %v454 = vunpack.c.h.b16 %v342
        %v455 = vunpack.c.l.b16 %v343
        %v456 = vunpack.c.h.b16 %v343
        %v457 = vunpack.c.l.b16 %v344
        %v458 = vunpack.c.h.b16 %v344
        %v459 = vunpack.c.l.b16 %v345
        %v460 = vunpack.c.h.b16 %v345
        %v461 = vunpack.c.l.b16 %v346
        %v462 = vunpack.c.h.b16 %v346
        %v463 = vunpack.c.l.b16 %v347
        %v464 = vunpack.c.h.b16 %v347
        %v465 = vunpack.c.l.b16 %v348
        %v466 = vunpack.c.h.b16 %v348
        %v467 = vunpack.c.l.b16 %v349
        %v468 = vunpack.c.h.b16 %v349
        %v469 = vunpack.c.l.b16 %v350
        %v470 = vunpack.c.h.b16 %v350
        %v471 = vunpack.c.l.b16 %v351
        %v472 = vunpack.c.h.b16 %v351
        %v473 = vunpack.c.l.b16 %v352
        %v474 = vunpack.c.h.b16 %v352
        %v475 = vunpack.c.l.b16 %v353
        %v476 = vunpack.c.h.b16 %v353
        %v477 = vunpack.c.l.b16 %v354
        %v478 = vunpack.c.h.b16 %v354
        %v479 = vunpack.c.l.b16 %v355
        %v480 = vunpack.c.h.b16 %v355
        %v481 = vunpack.c.l.b16 %v356
        %v482 = vunpack.c.h.b16 %v356
        %v483 = vunpack.c.l.b16 %v357
        %v484 = vunpack.c.h.b16 %v357
        %v485 = vunpack.c.l.b16 %v358
        %v486 = vunpack.c.h.b16 %v358
        %v487 = vpack.c.b16 %v425, %v423
        %v488 = vpack.c.b16 %v426, %v424
        %v489 = vpack.c.b16 %v429, %v427
        %v490 = vpack.c.b16 %v430, %v428
        %v491 = vpack.c.b16 %v433, %v431
        %v492 = vpack.c.b16 %v434, %v432
        %v493 = vpack.c.b16 %v437, %v435
        %v494 = vpack.c.b16 %v438, %v436
        %v495 = vpack.c.b16 %v441, %v439
        %v496 = vpack.c.b16 %v442, %v440
        %v497 = vpack.c.b16 %v445, %v443
        %v498 = vpack.c.b16 %v446, %v444
        %v499 = vpack.c.b16 %v449, %v447
        %v500 = vpack.c.b16 %v450, %v448
        %v501 = vpack.c.b16 %v453, %v451
        %v502 = vpack.c.b16 %v454, %v452
        %v503 = vpack.c.b16 %v457, %v455
        %v504 = vpack.c.b16 %v458, %v456
        %v505 = vpack.c.b16 %v461, %v459
        %v506 = vpack.c.b16 %v462, %v460
        %v507 = vpack.c.b16 %v465, %v463
        %v508 = vpack.c.b16 %v466, %v464
        %v509 = vpack.c.b16 %v469, %v467
        %v510 = vpack.c.b16 %v470, %v468
        %v511 = vpack.c.b16 %v473, %v471
        %v512 = vpack.c.b16 %v474, %v472
        %v513 = vpack.c.b16 %v477, %v475
        %v514 = vpack.c.b16 %v478, %v476
        %v515 = vpack.c.b16 %v481, %v479
        %v516 = vpack.c.b16 %v482, %v480
        %v517 = vpack.c.b16 %v485, %v483
        %v518 = vpack.c.b16 %v486, %v484
        %v583 = vunpack.c.l.b16 %v359
        %v584 = vunpack.c.l.b16 %v360
        %v585 = vunpack.c.l.b16 %v361
        %v586 = vunpack.c.l.b16 %v362
        %v587 = vunpack.c.l.b16 %v363
        %v588 = vunpack.c.l.b16 %v364
        %v589 = vunpack.c.l.b16 %v365
        %v590 = vunpack.c.l.b16 %v366
        %v591 = vunpack.c.l.b16 %v367
        %v592 = vunpack.c.l.b16 %v368
        %v593 = vunpack.c.l.b16 %v369
        %v594 = vunpack.c.l.b16 %v370
        %v595 = vunpack.c.l.b16 %v371
        %v596 = vunpack.c.l.b16 %v372
        %v597 = vunpack.c.l.b16 %v373
        %v598 = vunpack.c.l.b16 %v374
        %v599 = vunpack.c.l.b16 %v375
        %v600 = vunpack.c.l.b16 %v376
        %v601 = vunpack.c.l.b16 %v377
        %v602 = vunpack.c.l.b16 %v378
        %v603 = vunpack.c.l.b16 %v379
        %v604 = vunpack.c.l.b16 %v380
        %v605 = vunpack.c.l.b16 %v381
        %v606 = vunpack.c.l.b16 %v382
        %v607 = vunpack.c.l.b16 %v383
        %v608 = vunpack.c.l.b16 %v384
        %v609 = vunpack.c.l.b16 %v385
        %v610 = vunpack.c.l.b16 %v386
        %v611 = vunpack.c.l.b16 %v387
        %v612 = vunpack.c.l.b16 %v388
        %v613 = vunpack.c.l.b16 %v389
        %v614 = vunpack.c.l.b16 %v390
        %v615 = vpack.c.b16 %v584, %v583
        %v616 = vpack.c.b16 %v586, %v585
        %v617 = vpack.c.b16 %v588, %v587
        %v618 = vpack.c.b16 %v590, %v589
        %v619 = vpack.c.b16 %v592, %v591
        %v620 = vpack.c.b16 %v594, %v593
        %v621 = vpack.c.b16 %v596, %v595
        %v622 = vpack.c.b16 %v598, %v597
        %v623 = vpack.c.b16 %v600, %v599
        %v624 = vpack.c.b16 %v602, %v601
        %v625 = vpack.c.b16 %v604, %v603
        %v626 = vpack.c.b16 %v606, %v605
        %v627 = vpack.c.b16 %v608, %v607
        %v628 = vpack.c.b16 %v610, %v609
        %v629 = vpack.c.b16 %v612, %v611
        %v630 = vpack.c.b16 %v614, %v613
        %647 = vmatpush.bf16.msra.mxu0 %v622
        %648 = vmatpush.bf16.msra.mxu0 %v621
        %649 = vmatpush.bf16.msra.mxu0 %v620
        %650 = vmatpush.bf16.msra.mxu0 %v619
        %651 = vmatpush.bf16.msra.mxu0 %v618
        %652 = vmatpush.bf16.msra.mxu0 %v617
        %653 = vmatpush.bf16.msra.mxu0 %v616
        %654 = vmatpush.bf16.msra.mxu0 %v615
        %655 = vmatmul.bf16.gmra.mxu0 %v487
        %v656 = vpop.f32.mrf.mxu0
        %v657 = vadd.f32 0.0, %v656
        %v658 = vpop.f32.mrf.mxu0
        %v659 = vadd.f32 0.0, %v658
        %660 = vmatmul.bf16.gmra.mxu0 %v489
        %v661 = vpop.f32.mrf.mxu0
        %v662 = vadd.f32 0.0, %v661
        %v663 = vpop.f32.mrf.mxu0
        %v664 = vadd.f32 0.0, %v663
        %665 = vmatmul.bf16.gmra.mxu0 %v491
        %v666 = vpop.f32.mrf.mxu0
        %v667 = vadd.f32 0.0, %v666
        %v668 = vpop.f32.mrf.mxu0
        %v669 = vadd.f32 0.0, %v668
        %670 = vmatmul.bf16.gmra.mxu0 %v493
        %v671 = vpop.f32.mrf.mxu0
        %v672 = vadd.f32 0.0, %v671
        %v673 = vpop.f32.mrf.mxu0
        %v674 = vadd.f32 0.0, %v673
        %675 = vmatmul.bf16.gmra.mxu0 %v495
        %v676 = vpop.f32.mrf.mxu0
        %v677 = vadd.f32 0.0, %v676
        %v678 = vpop.f32.mrf.mxu0
        %v679 = vadd.f32 0.0, %v678
        %680 = vmatmul.bf16.gmra.mxu0 %v497
        %v681 = vpop.f32.mrf.mxu0
        %v682 = vadd.f32 0.0, %v681
        %v683 = vpop.f32.mrf.mxu0
        %v684 = vadd.f32 0.0, %v683
        %685 = vmatmul.bf16.gmra.mxu0 %v499
        %v686 = vpop.f32.mrf.mxu0
        %v687 = vadd.f32 0.0, %v686
        %v688 = vpop.f32.mrf.mxu0
        %v689 = vadd.f32 0.0, %v688
        %690 = vmatmul.bf16.gmra.mxu0 %v501
        %v691 = vpop.f32.mrf.mxu0
        %v692 = vadd.f32 0.0, %v691
        %v693 = vpop.f32.mrf.mxu0
        %v694 = vadd.f32 0.0, %v693
        %695 = vmatmul.bf16.gmra.mxu0 %v503
        %v696 = vpop.f32.mrf.mxu0
        %v697 = vadd.f32 0.0, %v696
        %v698 = vpop.f32.mrf.mxu0
        %v699 = vadd.f32 0.0, %v698
        %700 = vmatmul.bf16.gmra.mxu0 %v505
        %v701 = vpop.f32.mrf.mxu0
        %v702 = vadd.f32 0.0, %v701
        %v703 = vpop.f32.mrf.mxu0
        %v704 = vadd.f32 0.0, %v703
        %705 = vmatmul.bf16.gmra.mxu0 %v507
        %v706 = vpop.f32.mrf.mxu0
        %v707 = vadd.f32 0.0, %v706
        %v708 = vpop.f32.mrf.mxu0
        %v709 = vadd.f32 0.0, %v708
        %710 = vmatmul.bf16.gmra.mxu0 %v509
        %v711 = vpop.f32.mrf.mxu0
        %v712 = vadd.f32 0.0, %v711
        %v713 = vpop.f32.mrf.mxu0
        %v714 = vadd.f32 0.0, %v713
        %715 = vmatmul.bf16.gmra.mxu0 %v511
        %v716 = vpop.f32.mrf.mxu0
        %v717 = vadd.f32 0.0, %v716
        %v718 = vpop.f32.mrf.mxu0
        %v719 = vadd.f32 0.0, %v718
        %720 = vmatmul.bf16.gmra.mxu0 %v513
        %v721 = vpop.f32.mrf.mxu0
        %v722 = vadd.f32 0.0, %v721
        %v723 = vpop.f32.mrf.mxu0
        %v724 = vadd.f32 0.0, %v723
        %725 = vmatmul.bf16.gmra.mxu0 %v515
        %v726 = vpop.f32.mrf.mxu0
        %v727 = vadd.f32 0.0, %v726
        %v728 = vpop.f32.mrf.mxu0
        %v729 = vadd.f32 0.0, %v728
        %730 = vmatmul.bf16.gmra.mxu0 %v517
        %v731 = vpop.f32.mrf.mxu0
        %v732 = vadd.f32 0.0, %v731
        %v733 = vpop.f32.mrf.mxu0
        %v734 = vadd.f32 0.0, %v733
        %735 = vdwg.mxu0
        %736 = vmatpush.bf16.msra.mxu0 %v630
        %737 = vmatpush.bf16.msra.mxu0 %v629
        %738 = vmatpush.bf16.msra.mxu0 %v628
        %739 = vmatpush.bf16.msra.mxu0 %v627
        %740 = vmatpush.bf16.msra.mxu0 %v626
        %741 = vmatpush.bf16.msra.mxu0 %v625
        %742 = vmatpush.bf16.msra.mxu0 %v624
        %743 = vmatpush.bf16.msra.mxu0 %v623
        %744 = vmatmul.bf16.gmra.mxu0 %v488
        %v745 = vpop.f32.mrf.mxu0
        %v746 = vadd.f32 %v657, %v745
        %v747 = vpop.f32.mrf.mxu0
        %v748 = vadd.f32 %v659, %v747
        %749 = vmatmul.bf16.gmra.mxu0 %v490
        %v750 = vpop.f32.mrf.mxu0
        %v751 = vadd.f32 %v662, %v750
        %v752 = vpop.f32.mrf.mxu0
        %v753 = vadd.f32 %v664, %v752
        %754 = vmatmul.bf16.gmra.mxu0 %v492
        %v755 = vpop.f32.mrf.mxu0
        %v756 = vadd.f32 %v667, %v755
        %v757 = vpop.f32.mrf.mxu0
        %v758 = vadd.f32 %v669, %v757
        %759 = vmatmul.bf16.gmra.mxu0 %v494
        %v760 = vpop.f32.mrf.mxu0
        %v761 = vadd.f32 %v672, %v760
        %v762 = vpop.f32.mrf.mxu0
        %v763 = vadd.f32 %v674, %v762
        %764 = vmatmul.bf16.gmra.mxu0 %v496
        %v765 = vpop.f32.mrf.mxu0
        %v766 = vadd.f32 %v677, %v765
        %v767 = vpop.f32.mrf.mxu0
        %v768 = vadd.f32 %v679, %v767
        %769 = vmatmul.bf16.gmra.mxu0 %v498
        %v770 = vpop.f32.mrf.mxu0
        %v771 = vadd.f32 %v682, %v770
        %v772 = vpop.f32.mrf.mxu0
        %v773 = vadd.f32 %v684, %v772
        %774 = vmatmul.bf16.gmra.mxu0 %v500
        %v775 = vpop.f32.mrf.mxu0
        %v776 = vadd.f32 %v687, %v775
        %v777 = vpop.f32.mrf.mxu0
        %v778 = vadd.f32 %v689, %v777
        %779 = vmatmul.bf16.gmra.mxu0 %v502
        %v780 = vpop.f32.mrf.mxu0
        %v781 = vadd.f32 %v692, %v780
        %v782 = vpop.f32.mrf.mxu0
        %v783 = vadd.f32 %v694, %v782
        %784 = vmatmul.bf16.gmra.mxu0 %v504
        %v785 = vpop.f32.mrf.mxu0
        %v786 = vadd.f32 %v697, %v785
        %v787 = vpop.f32.mrf.mxu0
        %v788 = vadd.f32 %v699, %v787
        %789 = vmatmul.bf16.gmra.mxu0 %v506
        %v790 = vpop.f32.mrf.mxu0
        %v791 = vadd.f32 %v702, %v790
        %v792 = vpop.f32.mrf.mxu0
        %v793 = vadd.f32 %v704, %v792
        %794 = vmatmul.bf16.gmra.mxu0 %v508
        %v795 = vpop.f32.mrf.mxu0
        %v796 = vadd.f32 %v707, %v795
        %v797 = vpop.f32.mrf.mxu0
        %v798 = vadd.f32 %v709, %v797
        %799 = vmatmul.bf16.gmra.mxu0 %v510
        %v800 = vpop.f32.mrf.mxu0
        %v801 = vadd.f32 %v712, %v800
        %v802 = vpop.f32.mrf.mxu0
        %v803 = vadd.f32 %v714, %v802
        %804 = vmatmul.bf16.gmra.mxu0 %v512
        %v805 = vpop.f32.mrf.mxu0
        %v806 = vadd.f32 %v717, %v805
        %v807 = vpop.f32.mrf.mxu0
        %v808 = vadd.f32 %v719, %v807
        %809 = vmatmul.bf16.gmra.mxu0 %v514
        %v810 = vpop.f32.mrf.mxu0
        %v811 = vadd.f32 %v722, %v810
        %v812 = vpop.f32.mrf.mxu0
        %v813 = vadd.f32 %v724, %v812
        %814 = vmatmul.bf16.gmra.mxu0 %v516
        %v815 = vpop.f32.mrf.mxu0
        %v816 = vadd.f32 %v727, %v815
        %v817 = vpop.f32.mrf.mxu0
        %v818 = vadd.f32 %v729, %v817
        %819 = vmatmul.bf16.gmra.mxu0 %v518
        %v820 = vpop.f32.mrf.mxu0
        %v821 = vadd.f32 %v732, %v820
        %v822 = vpop.f32.mrf.mxu0
        %v823 = vadd.f32 %v734, %v822
        %824 = vdwg.mxu0
        %v825 = vadd.f32 %v295, %v746
        %v826 = vadd.f32 %v296, %v748
        %v827 = vadd.f32 %v297, %v751
        %v828 = vadd.f32 %v298, %v753
        %v829 = vadd.f32 %v299, %v756
        %v830 = vadd.f32 %v300, %v758
        %v831 = vadd.f32 %v301, %v761
        %v832 = vadd.f32 %v302, %v763
        %v833 = vadd.f32 %v303, %v766
        %v834 = vadd.f32 %v304, %v768
        %v835 = vadd.f32 %v305, %v771
        %v836 = vadd.f32 %v306, %v773
        %v837 = vadd.f32 %v307, %v776
        %v838 = vadd.f32 %v308, %v778
        %v839 = vadd.f32 %v309, %v781
        %v840 = vadd.f32 %v310, %v783
        %v841 = vadd.f32 %v311, %v786
        %v842 = vadd.f32 %v312, %v788
        %v843 = vadd.f32 %v313, %v791
        %v844 = vadd.f32 %v314, %v793
        %v845 = vadd.f32 %v315, %v796
        %v846 = vadd.f32 %v316, %v798
        %v847 = vadd.f32 %v317, %v801
        %v848 = vadd.f32 %v318, %v803
        %v849 = vadd.f32 %v319, %v806
        %v850 = vadd.f32 %v320, %v808
        %v851 = vadd.f32 %v321, %v811
        %v852 = vadd.f32 %v322, %v813
        %v853 = vadd.f32 %v323, %v816
        %v854 = vadd.f32 %v324, %v818
        %v855 = vadd.f32 %v325, %v821
        %v856 = vadd.f32 %v326, %v823
        %857 = vst [vmem:[#allocation2] sm:$0xff] %v825
        %858 = vst [vmem:[#allocation2 + $0x8] sm:$0xff] %v826
        %859 = vst [vmem:[#allocation2 + $0x10] sm:$0xff] %v827
        %860 = vst [vmem:[#allocation2 + $0x18] sm:$0xff] %v828
        %861 = vst [vmem:[#allocation2 + $0x20] sm:$0xff] %v829
        %862 = vst [vmem:[#allocation2 + $0x28] sm:$0xff] %v830
        %863 = vst [vmem:[#allocation2 + $0x30] sm:$0xff] %v831
        %864 = vst [vmem:[#allocation2 + $0x38] sm:$0xff] %v832
        %865 = vst [vmem:[#allocation2 + $0x40] sm:$0xff] %v833
        %866 = vst [vmem:[#allocation2 + $0x48] sm:$0xff] %v834
        %867 = vst [vmem:[#allocation2 + $0x50] sm:$0xff] %v835
        %868 = vst [vmem:[#allocation2 + $0x58] sm:$0xff] %v836
        %869 = vst [vmem:[#allocation2 + $0x60] sm:$0xff] %v837
        %870 = vst [vmem:[#allocation2 + $0x68] sm:$0xff] %v838
        %871 = vst [vmem:[#allocation2 + $0x70] sm:$0xff] %v839
        %872 = vst [vmem:[#allocation2 + $0x78] sm:$0xff] %v840
        %873 = vst [vmem:[#allocation2 + $0x80] sm:$0xff] %v841
        %874 = vst [vmem:[#allocation2 + $0x88] sm:$0xff] %v842
        %875 = vst [vmem:[#allocation2 + $0x90] sm:$0xff] %v843
        %876 = vst [vmem:[#allocation2 + $0x98] sm:$0xff] %v844
        %877 = vst [vmem:[#allocation2 + $0xa0] sm:$0xff] %v845
        %878 = vst [vmem:[#allocation2 + $0xa8] sm:$0xff] %v846
        %879 = vst [vmem:[#allocation2 + $0xb0] sm:$0xff] %v847
        %880 = vst [vmem:[#allocation2 + $0xb8] sm:$0xff] %v848
        %881 = vst [vmem:[#allocation2 + $0xc0] sm:$0xff] %v849
        %882 = vst [vmem:[#allocation2 + $0xc8] sm:$0xff] %v850
        %883 = vst [vmem:[#allocation2 + $0xd0] sm:$0xff] %v851
        %884 = vst [vmem:[#allocation2 + $0xd8] sm:$0xff] %v852
        %885 = vst [vmem:[#allocation2 + $0xe0] sm:$0xff] %v853
        %886 = vst [vmem:[#allocation2 + $0xe8] sm:$0xff] %v854
        %887 = vst [vmem:[#allocation2 + $0xf0] sm:$0xff] %v855
        %888 = vst [vmem:[#allocation2 + $0xf8] sm:$0xff] %v856
        // Predicated region
        $region37: #{matmul_pallas.1} parent=31 // pred_check
          %p889 = pneg %p259
        $region38: #{matmul_pallas.1} parent=31 // pred_check_branch
          %891 = sbr.rel (%p889) target = $region40
        $region39: #{matmul_pallas.1} parent=31 // pred_region
          %v892 = vld [vmem:[#allocation2] sm:$0xff]
          %v893 = vld [vmem:[#allocation2 + $0x8] sm:$0xff]
          %v894 = vld [vmem:[#allocation2 + $0x10] sm:$0xff]
          %v895 = vld [vmem:[#allocation2 + $0x18] sm:$0xff]
          %v896 = vld [vmem:[#allocation2 + $0x20] sm:$0xff]
          %v897 = vld [vmem:[#allocation2 + $0x28] sm:$0xff]
          %v898 = vld [vmem:[#allocation2 + $0x30] sm:$0xff]
          %v899 = vld [vmem:[#allocation2 + $0x38] sm:$0xff]
          %v900 = vld [vmem:[#allocation2 + $0x40] sm:$0xff]
          %v901 = vld [vmem:[#allocation2 + $0x48] sm:$0xff]
          %v902 = vld [vmem:[#allocation2 + $0x50] sm:$0xff]
          %v903 = vld [vmem:[#allocation2 + $0x58] sm:$0xff]
          %v904 = vld [vmem:[#allocation2 + $0x60] sm:$0xff]
          %v905 = vld [vmem:[#allocation2 + $0x68] sm:$0xff]
          %v906 = vld [vmem:[#allocation2 + $0x70] sm:$0xff]
          %v907 = vld [vmem:[#allocation2 + $0x78] sm:$0xff]
          %v908 = vld [vmem:[#allocation2 + $0x80] sm:$0xff]
          %v909 = vld [vmem:[#allocation2 + $0x88] sm:$0xff]
          %v910 = vld [vmem:[#allocation2 + $0x90] sm:$0xff]
          %v911 = vld [vmem:[#allocation2 + $0x98] sm:$0xff]
          %v912 = vld [vmem:[#allocation2 + $0xa0] sm:$0xff]
          %v913 = vld [vmem:[#allocation2 + $0xa8] sm:$0xff]
          %v914 = vld [vmem:[#allocation2 + $0xb0] sm:$0xff]
          %v915 = vld [vmem:[#allocation2 + $0xb8] sm:$0xff]
          %v916 = vld [vmem:[#allocation2 + $0xc0] sm:$0xff]
          %v917 = vld [vmem:[#allocation2 + $0xc8] sm:$0xff]
          %v918 = vld [vmem:[#allocation2 + $0xd0] sm:$0xff]
          %v919 = vld [vmem:[#allocation2 + $0xd8] sm:$0xff]
          %v920 = vld [vmem:[#allocation2 + $0xe0] sm:$0xff]
          %v921 = vld [vmem:[#allocation2 + $0xe8] sm:$0xff]
          %v922 = vld [vmem:[#allocation2 + $0xf0] sm:$0xff]
          %v923 = vld [vmem:[#allocation2 + $0xf8] sm:$0xff]
          %v924 = vld [vmem:[%s257] sm:$0x1]
          %v926 = vperm.slane %v924, 0
          %v928 = vadd.f32 %v892, %v926
          %v929 = vadd.f32 %v893, %v926
          %v930 = vadd.f32 %v894, %v926
          %v931 = vadd.f32 %v895, %v926
          %v932 = vadd.f32 %v896, %v926
          %v933 = vadd.f32 %v897, %v926
          %v934 = vadd.f32 %v898, %v926
          %v935 = vadd.f32 %v899, %v926
          %v936 = vadd.f32 %v900, %v926
          %v937 = vadd.f32 %v901, %v926
          %v938 = vadd.f32 %v902, %v926
          %v939 = vadd.f32 %v903, %v926
          %v940 = vadd.f32 %v904, %v926
          %v941 = vadd.f32 %v905, %v926
          %v942 = vadd.f32 %v906, %v926
          %v943 = vadd.f32 %v907, %v926
          %v944 = vadd.f32 %v908, %v926
          %v945 = vadd.f32 %v909, %v926
          %v946 = vadd.f32 %v910, %v926
          %v947 = vadd.f32 %v911, %v926
          %v948 = vadd.f32 %v912, %v926
          %v949 = vadd.f32 %v913, %v926
          %v950 = vadd.f32 %v914, %v926
          %v951 = vadd.f32 %v915, %v926
          %v952 = vadd.f32 %v916, %v926
          %v953 = vadd.f32 %v917, %v926
          %v954 = vadd.f32 %v918, %v926
          %v955 = vadd.f32 %v919, %v926
          %v956 = vadd.f32 %v920, %v926
          %v957 = vadd.f32 %v921, %v926
          %v958 = vadd.f32 %v922, %v926
          %v959 = vadd.f32 %v923, %v926
          %v960 = vpack.c.bf16 %v928, %v928
          %v961 = vpack.c.bf16 %v929, %v929
          %v962 = vpack.c.bf16 %v930, %v930
          %v963 = vpack.c.bf16 %v931, %v931
          %v964 = vpack.c.bf16 %v932, %v932
          %v965 = vpack.c.bf16 %v933, %v933
          %v966 = vpack.c.bf16 %v934, %v934
          %v967 = vpack.c.bf16 %v935, %v935
          %v968 = vpack.c.bf16 %v936, %v936
          %v969 = vpack.c.bf16 %v937, %v937
          %v970 = vpack.c.bf16 %v938, %v938
          %v971 = vpack.c.bf16 %v939, %v939
          %v972 = vpack.c.bf16 %v940, %v940
          %v973 = vpack.c.bf16 %v941, %v941
          %v974 = vpack.c.bf16 %v942, %v942
          %v975 = vpack.c.bf16 %v943, %v943
          %v976 = vpack.c.bf16 %v944, %v944
          %v977 = vpack.c.bf16 %v945, %v945
          %v978 = vpack.c.bf16 %v946, %v946
          %v979 = vpack.c.bf16 %v947, %v947
          %v980 = vpack.c.bf16 %v948, %v948
          %v981 = vpack.c.bf16 %v949, %v949
          %v982 = vpack.c.bf16 %v950, %v950
          %v983 = vpack.c.bf16 %v951, %v951
          %v984 = vpack.c.bf16 %v952, %v952
          %v985 = vpack.c.bf16 %v953, %v953
          %v986 = vpack.c.bf16 %v954, %v954
          %v987 = vpack.c.bf16 %v955, %v955
          %v988 = vpack.c.bf16 %v956, %v956
          %v989 = vpack.c.bf16 %v957, %v957
          %v990 = vpack.c.bf16 %v958, %v958
          %v991 = vpack.c.bf16 %v959, %v959
          %992 = vst [vmem:[%s233] sm:$0xf] %v960
          %993 = vst [vmem:[%s233 + $0x4] sm:$0xf] %v961
          %994 = vst [vmem:[%s233 + $0x8] sm:$0xf] %v962
          %995 = vst [vmem:[%s233 + $0xc] sm:$0xf] %v963
          %996 = vst [vmem:[%s233 + $0x10] sm:$0xf] %v964
          %997 = vst [vmem:[%s233 + $0x14] sm:$0xf] %v965
          %998 = vst [vmem:[%s233 + $0x18] sm:$0xf] %v966
          %999 = vst [vmem:[%s233 + $0x1c] sm:$0xf] %v967
          %1000 = vst [vmem:[%s233 + $0x20] sm:$0xf] %v968
          %1001 = vst [vmem:[%s233 + $0x24] sm:$0xf] %v969
          %1002 = vst [vmem:[%s233 + $0x28] sm:$0xf] %v970
          %1003 = vst [vmem:[%s233 + $0x2c] sm:$0xf] %v971
          %1004 = vst [vmem:[%s233 + $0x30] sm:$0xf] %v972
          %1005 = vst [vmem:[%s233 + $0x34] sm:$0xf] %v973
          %1006 = vst [vmem:[%s233 + $0x38] sm:$0xf] %v974
          %1007 = vst [vmem:[%s233 + $0x3c] sm:$0xf] %v975
          %1008 = vst [vmem:[%s233 + $0x40] sm:$0xf] %v976
          %1009 = vst [vmem:[%s233 + $0x44] sm:$0xf] %v977
          %1010 = vst [vmem:[%s233 + $0x48] sm:$0xf] %v978
          %1011 = vst [vmem:[%s233 + $0x4c] sm:$0xf] %v979
          %1012 = vst [vmem:[%s233 + $0x50] sm:$0xf] %v980
          %1013 = vst [vmem:[%s233 + $0x54] sm:$0xf] %v981
          %1014 = vst [vmem:[%s233 + $0x58] sm:$0xf] %v982
          %1015 = vst [vmem:[%s233 + $0x5c] sm:$0xf] %v983
          %1016 = vst [vmem:[%s233 + $0x60] sm:$0xf] %v984
          %1017 = vst [vmem:[%s233 + $0x64] sm:$0xf] %v985
          %1018 = vst [vmem:[%s233 + $0x68] sm:$0xf] %v986
          %1019 = vst [vmem:[%s233 + $0x6c] sm:$0xf] %v987
          %1020 = vst [vmem:[%s233 + $0x70] sm:$0xf] %v988
          %1021 = vst [vmem:[%s233 + $0x74] sm:$0xf] %v989
          %1022 = vst [vmem:[%s233 + $0x78] sm:$0xf] %v990
          %1023 = vst [vmem:[%s233 + $0x7c] sm:$0xf] %v991
        $region40: #{matmul_pallas.1} parent=31 // pred_fallthru
          _
        %s1024 = sand.u32 %s128, 1
        %s1025 = scalar_lea.sflag [#allocation4], %s1024
        %s1026 = sand.u32 %s128, 1
        %s1027 = smul.addr %s1026, 128
        %s1028 = scalar_lea.vmem [#allocation3], %s1027
        // Predicated region
        $region41: #{matmul_pallas.1} parent=31 // pred_check
          %p1029 = pneg %p138
        $region42: #{matmul_pallas.1} parent=31 // pred_check_branch
          %1031 = sbr.rel (%p1029) target = $region44
        $region43: #{matmul_pallas.1} parent=31 // pred_region
          %s1032 = smul.u32 32, %s22
          %1034 = vsyncadd %s1025, 0
          %s1035 = sadd.s32 %s23, %s1032
          %s1036 = smul.addr %s1035, 4
          %s1037 = scalar_lea.hbm %s3, %s1036
          %s1038 = sshll.u32 %s1028, 4
          %s1039 = int_to_ptr.vmem [resolvable:$true] %s1038
          %s1040 = sshll.u32 %s1037, 4
          %s1041 = int_to_ptr.hbm [resolvable:$true] %s1040
          %1046 = dma.vmem_to_hbm [thread:$0]  %s1039, 2048, %s1041, %s1025, 64, 64, 4
        $region44: #{matmul_pallas.1} parent=31 // pred_fallthru
          _
      $region32: #{matmul_pallas.1} parent=5 // pred_fallthru
        _
      %p1047 = scmp.le.s32.totalorder 2, %s12
      // Predicated region
      $region45: #{matmul_pallas.1} parent=5 // pred_check
        %p1048 = pneg %p1047
      $region46: #{matmul_pallas.1} parent=5 // pred_check_branch
        %1050 = sbr.rel (%p1048) target = $region48
      $region47: #{matmul_pallas.1} parent=5 // pred_region
        %s1051 = ssub.s32 %s12, 2
        // Predicated region
        $region49: #{matmul_pallas.1} parent=47 // pred_check
          %p1052 = pneg %p144
        $region50: #{matmul_pallas.1} parent=47 // pred_check_branch
          %1054 = sbr.rel (%p1052) target = $region52
        $region51: #{matmul_pallas.1} parent=47 // pred_region
          %s1055 = sand.u32 %s129, 1
          %s1056 = scalar_lea.sflag [#allocation4], %s1055
          %s1057 = sand.u32 %s129, 1
          %s1058 = smul.addr %s1057, 128
          %s1059 = scalar_lea.vmem [#allocation3], %s1058
          %1061 = dma.done %s1056, 2048
        $region52: #{matmul_pallas.1} parent=47 // pred_fallthru
          _
      $region48: #{matmul_pallas.1} parent=5 // pred_fallthru
        _
    $region6: #{matmul_pallas.1} parent=1 // loop_footer
      %s16 = sadd.s32 1, %s12
    $region7: #{matmul_pallas.1} parent=1 // loop_footer_branch
      %11 = sbr.rel target = $region3
    $region8: #{matmul_pallas.1} parent=1 // loop_exit
      _
    %1062 = vsyncpa [#allocation4], 1
    %s1063 = scalar_lea.sflag [#allocation4], 1
    %1064 = vsyncpa %s1063, 1

</llo_original>
